<compile_context>
chip_gen: v7x
topology: tpu7x:2x2x1
jax: 0.10.0
libtpu: 0.0.40
codegen_flags: <defaults>
</compile_context>

<pallas_src>
import jax
import jax.numpy as jnp
from jax.experimental import pallas as pl


def _conv1x1_bias_sigmoid_kernel(x_ref, wt_ref, b_ref, o_ref):
    # x_ref : (C_in, NHW)    wt_ref : (C_out, C_in)
    # b_ref : (C_out, NHW)   o_ref  : (C_out, NHW)
    acc = jnp.dot(wt_ref[...], x_ref[...], preferred_element_type=jnp.float32)
    acc = acc + b_ref[...]
    # sigmoid(x) == 0.5 * tanh(0.5 * x) + 0.5 : exact identity, transcendental
    # goes to the EUP slot.
    o_ref[...] = (0.5 * jnp.tanh(0.5 * acc) + 0.5).astype(o_ref.dtype)


def conv_transpose_1x1_sigmoid(x_nchw, weight, bias):
    """x_nchw: (N, C_in, H, W); weight: (C_in, C_out); bias: (C_out,)."""
    N, C_in, H, W = x_nchw.shape
    C_out = weight.shape[1]
    NHW = N * H * W

    # Channel-major with batch+spatial collapsed onto the lane axis.  For
    # N == 1 (the module's shape) this is a pure reshape; for N > 1 it is a
    # tiny (~x-sized) transpose, still negligible versus launch cost.
    x_cm = jnp.transpose(x_nchw, (1, 0, 2, 3)).reshape(C_in, NHW)
    w_t = weight.T                                        # (C_out, C_in), ~8 KB
    b_bcast = jnp.broadcast_to(bias[:, None], (C_out, NHW))

    # One grid step: the entire problem is one (C_out,C_in)@(C_in,NHW) matmul.
    # Block shapes equal the full array dims, so the (8,128) tiling rule is
    # satisfied; total VMEM footprint (double-buffered) is well under 1 MiB.
    out_flat = pl.pallas_call(
        _conv1x1_bias_sigmoid_kernel,
        out_shape=jax.ShapeDtypeStruct((C_out, NHW), x_nchw.dtype),
        grid=(1,),
        in_specs=[
            pl.BlockSpec((C_in, NHW), lambda i: (0, 0)),
            pl.BlockSpec((C_out, C_in), lambda i: (0, 0)),
            pl.BlockSpec((C_out, NHW), lambda i: (0, 0)),
        ],
        out_specs=pl.BlockSpec((C_out, NHW), lambda i: (0, 0)),
    )(x_cm, w_t, b_bcast)

    # (C_out, N*H*W) -> (N, C_out, H, W); free for N == 1.
    return out_flat.reshape(C_out, N, H, W).transpose(1, 0, 2, 3)


if __name__ == "__main__":
    key = jax.random.PRNGKey(0)
    k_x, k_w, k_b = jax.random.split(key, 3)

    # Shapes from the PyTorch spec: x1 = (1, 64, 54, 16); ConvTranspose2d(64 -> 31).
    N, C_in, C_out, H, W = 1, 64, 31, 54, 16

    x = jax.random.normal(k_x, (N, C_in, H, W), dtype=jnp.float32)
    # ConvTranspose2d weight is (C_in, C_out, 1, 1); keep the (C_in, C_out) matrix.
    weight = jax.random.normal(k_w, (C_in, C_out), dtype=jnp.float32) * 0.05
    bias = jax.random.normal(k_b, (C_out,), dtype=jnp.float32) * 0.05

    out = conv_transpose_1x1_sigmoid(x, weight, bias)
    out = jax.block_until_ready(out)

    # Reference in plain JAX (same math as the PyTorch module).
    ref = jax.nn.sigmoid(
        jnp.einsum("nchw,co->nohw", x, weight) + bias[None, :, None, None]
    )
    assert out.shape == (N, C_out, H, W)
    assert jnp.allclose(out, ref, atol=1e-5, rtol=1e-5)

    print("KERNEL_OK")
</pallas_src>

<mosaic_0001>
module attributes {stable_mosaic.version = 11 : i64} {
  func.func @_conv1x1_bias_sigmoid_kernel(%arg0: i32, %arg1: memref<64x864xf32, #tpu.memory_space<vmem>>, %arg2: memref<31x64xf32, #tpu.memory_space<vmem>>, %arg3: memref<31x864xf32, #tpu.memory_space<vmem>>, %arg4: memref<31x864xf32, #tpu.memory_space<vmem>>) attributes {dimension_semantics = [#tpu.dimension_semantics<arbitrary>], iteration_bounds = array<i64: 1>, scalar_prefetch = 0 : i64, scratch_operands = 0 : i64, tpu.core_type = #tpu.core_type<tc>, window_params = [{pipeline_mode = #tpu.pipeline_mode<synchronous>, transform_indices = @transform_0, window_bounds = array<i64: 64, 864>}, {pipeline_mode = #tpu.pipeline_mode<synchronous>, transform_indices = @transform_1, window_bounds = array<i64: 31, 64>}, {pipeline_mode = #tpu.pipeline_mode<synchronous>, transform_indices = @transform_2, window_bounds = array<i64: 31, 864>}, {pipeline_mode = #tpu.pipeline_mode<synchronous>, transform_indices = @transform_3, window_bounds = array<i64: 31, 864>}]} {
    %c0 = arith.constant 0 : index
    %c0_0 = arith.constant 0 : index
    %0 = vector.load %arg2[%c0, %c0_0] : memref<31x64xf32, #tpu.memory_space<vmem>>, vector<31x64xf32>
    %c0_1 = arith.constant 0 : index
    %c0_2 = arith.constant 0 : index
    %1 = vector.load %arg1[%c0_1, %c0_2] : memref<64x864xf32, #tpu.memory_space<vmem>>, vector<64x864xf32>
    %cst = arith.constant dense<0.000000e+00> : vector<31x864xf32>
    %2 = tpu.matmul %0, %1, %cst {dimension_numbers = #tpu.dot_dimension_numbers<[1], [0], [0], [1], [0, 0, 1, 1], [], []>} : vector<31x64xf32>, vector<64x864xf32>, vector<31x864xf32> -> vector<31x864xf32>
    %c0_3 = arith.constant 0 : index
    %c0_4 = arith.constant 0 : index
    %3 = vector.load %arg3[%c0_3, %c0_4] : memref<31x864xf32, #tpu.memory_space<vmem>>, vector<31x864xf32>
    %4 = arith.addf %2, %3 : vector<31x864xf32>
    %cst_5 = arith.constant 5.000000e-01 : f32
    %5 = vector.broadcast %cst_5 : f32 to vector<31x864xf32>
    %6 = arith.mulf %5, %4 : vector<31x864xf32>
    %7 = math.tanh %6 : vector<31x864xf32>
    %cst_6 = arith.constant 5.000000e-01 : f32
    %8 = vector.broadcast %cst_6 : f32 to vector<31x864xf32>
    %9 = arith.mulf %8, %7 : vector<31x864xf32>
    %cst_7 = arith.constant 5.000000e-01 : f32
    %10 = vector.broadcast %cst_7 : f32 to vector<31x864xf32>
    %11 = arith.addf %9, %10 : vector<31x864xf32>
    %c0_8 = arith.constant 0 : index
    %c0_9 = arith.constant 0 : index
    %12 = vector.load %arg4[%c0_8, %c0_9] : memref<31x864xf32, #tpu.memory_space<vmem>>, vector<31x864xf32>
    tpu.vector_store %arg4[%c0_8, %c0_9], %11 {strides = array<i32>} : memref<31x864xf32, #tpu.memory_space<vmem>>, vector<31x864xf32>,
    return
  }
  func.func @transform_0(%arg0: i32) -> (i32, i32) {
    %c0_i32 = arith.constant 0 : i32
    %c0_i32_0 = arith.constant 0 : i32
    %c0_i32_1 = arith.constant 0 : i32
    return %c0_i32, %c0_i32_0 : i32, i32
  }
  func.func @transform_1(%arg0: i32) -> (i32, i32) {
    %c0_i32 = arith.constant 0 : i32
    %c0_i32_0 = arith.constant 0 : i32
    %c0_i32_1 = arith.constant 0 : i32
    return %c0_i32, %c0_i32_0 : i32, i32
  }
  func.func @transform_2(%arg0: i32) -> (i32, i32) {
    %c0_i32 = arith.constant 0 : i32
    %c0_i32_0 = arith.constant 0 : i32
    %c0_i32_1 = arith.constant 0 : i32
    return %c0_i32, %c0_i32_0 : i32, i32
  }
  func.func @transform_3(%arg0: i32) -> (i32, i32) {
    %c0_i32 = arith.constant 0 : i32
    %c0_i32_0 = arith.constant 0 : i32
    %c0_i32_1 = arith.constant 0 : i32
    return %c0_i32, %c0_i32_0 : i32, i32
  }
}

</mosaic_0001>

<llo_original>
// kernel: tpu_custom_call.1
$region0: #{tpu_custom_call.1}
  #allocation0 [shape = 'u32[]', space=smem, size = 0x4, offset = 0x4, fixed_abs, tag = 'smem constant byte address 0x4 - core index']
  #allocation1 [shape = 'u32[144,128]{1,0:T(1,128)}', space=vmem, size = 0x12000, scoped, tag = 'internal scratch']
  %s0 = inlined_call_operand.hbm [shape: f32[64,864], index: 0, kind: input, shape index: {}]
  %s1 = inlined_call_operand.hbm [shape: f32[31,64], index: 1, kind: input, shape index: {}]
  %s2 = inlined_call_operand.hbm [shape: f32[31,864], index: 2, kind: input, shape index: {}]
  %s3 = inlined_call_operand.hbm [shape: f32[31,864], index: 3, kind: output, shape index: {}]
  %s4 = sld [smem:[#allocation0]]
  $region34: #{tpu_custom_call.1} parent=0
    _
  %s6 = ssub.s32 1, %s4
  %s7 = scalar_select 0, %s6, %s4
  $region1: #{tpu_custom_call.1} parent=0
    #allocation2 [shape = 'u8[229376]{0}', space=vmem, size = 0x38000, scoped, tag = 'input window, operand 0, single buffered']
    #allocation3 [shape = 's32[1]{0}', space=sflag, size = 0x4, scoped, tag = 'scoped memory for tpu_custom_call.1']
    #allocation4 [shape = 's32[1]{0}', space=sflag, size = 0x4, scoped, tag = 'scoped memory for tpu_custom_call.1']
    #allocation5 [shape = 'u8[16384]{0}', space=vmem, size = 0x4000, scoped, tag = 'input window, operand 1, single buffered']
    #allocation6 [shape = 's32[1]{0}', space=sflag, size = 0x4, scoped, tag = 'scoped memory for tpu_custom_call.1']
    #allocation7 [shape = 'u8[114688]{0}', space=vmem, size = 0x1c000, scoped, tag = 'input window, operand 2, single buffered']
    #allocation8 [shape = 'u8[114688]{0}', space=vmem, size = 0x1c000, scoped, tag = 'output window, operand 0, single buffered']
    %8 = vsyncpa [#allocation3], 0
    %9 = vsyncpa [#allocation6], 0
    %10 = vsyncpa [#allocation4], 0
    // Predicated region
    $region2: #{tpu_custom_call.1} parent=1 // pred_check
      _
    $region3: #{tpu_custom_call.1} parent=1 // pred_check_branch
      %12 = sbr.rel (0) target = $region5
    $region4: #{tpu_custom_call.1} parent=1 // pred_region
      %s14 = ssub.s32 7168, 7168
      %15 = vsyncadd [#allocation3], %s14
      %s16 = sshll.u32 [#allocation2], 4
      %s17 = int_to_ptr.vmem [resolvable:$true] %s16
      %22 = dma.hbm_to_vmem [thread:$0]  %s0, 7168, %s17, [#allocation3], 896, 896, 56
    $region5: #{tpu_custom_call.1} parent=1 // pred_fallthru
      _
    // Predicated region
    $region6: #{tpu_custom_call.1} parent=1 // pred_check
      _
    $region7: #{tpu_custom_call.1} parent=1 // pred_check_branch
      %24 = sbr.rel (0) target = $region9
    $region8: #{tpu_custom_call.1} parent=1 // pred_region
      %s26 = ssub.s32 512, 512
      %27 = vsyncadd [#allocation6], %s26
      %s28 = sshll.u32 [#allocation5], 4
      %s29 = int_to_ptr.vmem [resolvable:$true] %s28
      %34 = dma.hbm_to_vmem [thread:$0]  %s1, 512, %s29, [#allocation6], 128, 128, 8
    $region9: #{tpu_custom_call.1} parent=1 // pred_fallthru
      _
    // Predicated region
    $region10: #{tpu_custom_call.1} parent=1 // pred_check
      _
    $region11: #{tpu_custom_call.1} parent=1 // pred_check_branch
      %36 = sbr.rel (0) target = $region13
    $region12: #{tpu_custom_call.1} parent=1 // pred_region
      %s38 = ssub.s32 3584, 3584
      %39 = vsyncadd [#allocation6], %s38
      %s40 = sshll.u32 [#allocation7], 4
      %s41 = int_to_ptr.vmem [resolvable:$true] %s40
      %46 = dma.hbm_to_vmem [thread:$0]  %s2, 3584, %s41, [#allocation6], 896, 896, 56
    $region13: #{tpu_custom_call.1} parent=1 // pred_fallthru
      _
    // Predicated region
    $region14: #{tpu_custom_call.1} parent=1 // pred_check
      _
    $region15: #{tpu_custom_call.1} parent=1 // pred_check_branch
      %48 = sbr.rel (0) target = $region17
    $region16: #{tpu_custom_call.1} parent=1 // pred_region
      %49 = dma.done [#allocation3], 7168
    $region17: #{tpu_custom_call.1} parent=1 // pred_fallthru
      _
    // Predicated region
    $region18: #{tpu_custom_call.1} parent=1 // pred_check
      _
    $region19: #{tpu_custom_call.1} parent=1 // pred_check_branch
      %51 = sbr.rel (0) target = $region21
    $region20: #{tpu_custom_call.1} parent=1 // pred_region
      %52 = dma.done [#allocation6], 512
    $region21: #{tpu_custom_call.1} parent=1 // pred_fallthru
      _
    // Predicated region
    $region22: #{tpu_custom_call.1} parent=1 // pred_check
      _
    $region23: #{tpu_custom_call.1} parent=1 // pred_check_branch
      %54 = sbr.rel (0) target = $region25
    $region24: #{tpu_custom_call.1} parent=1 // pred_region
      %55 = dma.done [#allocation6], 3584
    $region25: #{tpu_custom_call.1} parent=1 // pred_fallthru
      _
    %v56 = vld [vmem:[#allocation5] sm:$0xff]
    %v57 = vld [vmem:[#allocation5 + $0x8] sm:$0xff]
    %v58 = vld [vmem:[#allocation5 + $0x10] sm:$0xff]
    %v59 = vld [vmem:[#allocation5 + $0x18] sm:$0x7f]
    %v60 = vld [vmem:[#allocation2] sm:$0xff]
    %v61 = vld [vmem:[#allocation2 + $0x8] sm:$0xff]
    %v62 = vld [vmem:[#allocation2 + $0x10] sm:$0xff]
    %v63 = vld [vmem:[#allocation2 + $0x18] sm:$0xff]
    %v64 = vld [vmem:[#allocation2 + $0x20] sm:$0xff]
    %v65 = vld [vmem:[#allocation2 + $0x28] sm:$0xff]
    %v66 = vld [vmem:[#allocation2 + $0x30] sm:$0xff]
    %v67 = vld [vmem:[#allocation2 + $0x38] sm:$0xff]
    %v68 = vld [vmem:[#allocation2 + $0x40] sm:$0xff]
    %v69 = vld [vmem:[#allocation2 + $0x48] sm:$0xff]
    %v70 = vld [vmem:[#allocation2 + $0x50] sm:$0xff]
    %v71 = vld [vmem:[#allocation2 + $0x58] sm:$0xff]
    %v72 = vld [vmem:[#allocation2 + $0x60] sm:$0xff]
    %v73 = vld [vmem:[#allocation2 + $0x68] sm:$0xff]
    %v74 = vld [vmem:[#allocation2 + $0x70] sm:$0xff]
    %v75 = vld [vmem:[#allocation2 + $0x78] sm:$0xff]
    %v76 = vld [vmem:[#allocation2 + $0x80] sm:$0xff]
    %v77 = vld [vmem:[#allocation2 + $0x88] sm:$0xff]
    %v78 = vld [vmem:[#allocation2 + $0x90] sm:$0xff]
    %v79 = vld [vmem:[#allocation2 + $0x98] sm:$0xff]
    %v80 = vld [vmem:[#allocation2 + $0xa0] sm:$0xff]
    %v81 = vld [vmem:[#allocation2 + $0xa8] sm:$0xff]
    %v82 = vld [vmem:[#allocation2 + $0xb0] sm:$0xff]
    %v83 = vld [vmem:[#allocation2 + $0xb8] sm:$0xff]
    %v84 = vld [vmem:[#allocation2 + $0xc0] sm:$0xff]
    %v85 = vld [vmem:[#allocation2 + $0xc8] sm:$0xff]
    %v86 = vld [vmem:[#allocation2 + $0xd0] sm:$0xff]
    %v87 = vld [vmem:[#allocation2 + $0xd8] sm:$0xff]
    %v88 = vld [vmem:[#allocation2 + $0xe0] sm:$0xff]
    %v89 = vld [vmem:[#allocation2 + $0xe8] sm:$0xff]
    %v90 = vld [vmem:[#allocation2 + $0xf0] sm:$0xff]
    %v91 = vld [vmem:[#allocation2 + $0xf8] sm:$0xff]
    %v92 = vld [vmem:[#allocation2 + $0x100] sm:$0xff]
    %v93 = vld [vmem:[#allocation2 + $0x108] sm:$0xff]
    %v94 = vld [vmem:[#allocation2 + $0x110] sm:$0xff]
    %v95 = vld [vmem:[#allocation2 + $0x118] sm:$0xff]
    %v96 = vld [vmem:[#allocation2 + $0x120] sm:$0xff]
    %v97 = vld [vmem:[#allocation2 + $0x128] sm:$0xff]
    %v98 = vld [vmem:[#allocation2 + $0x130] sm:$0xff]
    %v99 = vld [vmem:[#allocation2 + $0x138] sm:$0xff]
    %v100 = vld [vmem:[#allocation2 + $0x140] sm:$0xff]
    %v101 = vld [vmem:[#allocation2 + $0x148] sm:$0xff]
    %v102 = vld [vmem:[#allocation2 + $0x150] sm:$0xff]
    %v103 = vld [vmem:[#allocation2 + $0x158] sm:$0xff]
    %v104 = vld [vmem:[#allocation2 + $0x160] sm:$0xff]
    %v105 = vld [vmem:[#allocation2 + $0x168] sm:$0xff]
    %v106 = vld [vmem:[#allocation2 + $0x170] sm:$0xff]
    %v107 = vld [vmem:[#allocation2 + $0x178] sm:$0xff]
    %v108 = vld [vmem:[#allocation2 + $0x180] sm:$0xff]
    %v109 = vld [vmem:[#allocation2 + $0x188] sm:$0xff]
    %v110 = vld [vmem:[#allocation2 + $0x190] sm:$0xff]
    %v111 = vld [vmem:[#allocation2 + $0x198] sm:$0xff]
    %v112 = vld [vmem:[#allocation2 + $0x1a0] sm:$0xff]
    %v113 = vld [vmem:[#allocation2 + $0x1a8] sm:$0xff]
    %v114 = vld [vmem:[#allocation2 + $0x1b0] sm:$0xff]
    %v115 = vld [vmem:[#allocation2 + $0x1b8] sm:$0xff]
    %v116 = vld [vmem:[#allocation7] sm:$0xff]
    %v117 = vld [vmem:[#allocation7 + $0x8] sm:$0xff]
    %v118 = vld [vmem:[#allocation7 + $0x10] sm:$0xff]
    %v119 = vld [vmem:[#allocation7 + $0x18] sm:$0xff]
    %v120 = vld [vmem:[#allocation7 + $0x20] sm:$0xff]
    %v121 = vld [vmem:[#allocation7 + $0x28] sm:$0xff]
    %v122 = vld [vmem:[#allocation7 + $0x30] sm:$0xff]
    %v123 = vld [vmem:[#allocation7 + $0x38] sm:$0xff]
    %v124 = vld [vmem:[#allocation7 + $0x40] sm:$0xff]
    %v125 = vld [vmem:[#allocation7 + $0x48] sm:$0xff]
    %v126 = vld [vmem:[#allocation7 + $0x50] sm:$0xff]
    %v127 = vld [vmem:[#allocation7 + $0x58] sm:$0xff]
    %v128 = vld [vmem:[#allocation7 + $0x60] sm:$0xff]
    %v129 = vld [vmem:[#allocation7 + $0x68] sm:$0xff]
    %v130 = vld [vmem:[#allocation7 + $0x70] sm:$0xff]
    %v131 = vld [vmem:[#allocation7 + $0x78] sm:$0xff]
    %v132 = vld [vmem:[#allocation7 + $0x80] sm:$0xff]
    %v133 = vld [vmem:[#allocation7 + $0x88] sm:$0xff]
    %v134 = vld [vmem:[#allocation7 + $0x90] sm:$0xff]
    %v135 = vld [vmem:[#allocation7 + $0x98] sm:$0xff]
    %v136 = vld [vmem:[#allocation7 + $0xa0] sm:$0xff]
    %v137 = vld [vmem:[#allocation7 + $0xa8] sm:$0x7f]
    %v138 = vld [vmem:[#allocation7 + $0xb0] sm:$0x7f]
    %v139 = vld [vmem:[#allocation7 + $0xb8] sm:$0x7f]
    %v140 = vld [vmem:[#allocation7 + $0xc0] sm:$0x7f]
    %v141 = vld [vmem:[#allocation7 + $0xc8] sm:$0x7f]
    %v142 = vld [vmem:[#allocation7 + $0xd0] sm:$0x7f]
    %v143 = vld [vmem:[#allocation7 + $0xd8] sm:$0x7f]
    %vm144 = vcmask 523264
    %v146 = vsel %vm144, %v56, 0
    %v149 = vsel %vm144, %v57, 0
    %v152 = vsel %vm144, %v58, 0
    %v155 = vsel %vm144, %v59, 0
    %157 = vmatprep.subr.mxu0 %v61
    %158 = vmatpush1.msra.mxu0 %v60
    %159 = vmatprep.subr.mxu0 %v68
    %160 = vmatpush1.msra.mxu0 %v67
    %161 = vmatprep.subr.mxu0 %v75
    %162 = vmatpush1.msra.mxu0 %v74
    %163 = vmatprep.subr.mxu0 %v82
    %164 = vmatpush1.msra.mxu0 %v81
    %165 = vmatprep.subr.mxu0 %v89
    %166 = vmatpush1.msra.mxu0 %v88
    %167 = vmatprep.subr.mxu0 %v96
    %168 = vmatpush1.msra.mxu0 %v95
    %169 = vmatprep.subr.mxu0 %v103
    %170 = vmatpush1.msra.mxu0 %v102
    %171 = vmatprep.subr.mxu0 %v110
    %172 = vmatpush1.msra.mxu0 %v109
    %173 = vmatprep.subr.mxu0 0.0
    %174 = vmatpush1.msra.mxu0 0.0
    %175 = vmatprep.subr.mxu0 0.0
    %176 = vmatpush1.msra.mxu0 0.0
    %177 = vmatprep.subr.mxu0 0.0
    %178 = vmatpush1.msra.mxu0 0.0
    %179 = vmatprep.subr.mxu0 0.0
    %180 = vmatpush1.msra.mxu0 0.0
    %181 = vmatprep.subr.mxu0 0.0
    %182 = vmatpush1.msra.mxu0 0.0
    %183 = vmatprep.subr.mxu0 0.0
    %184 = vmatpush1.msra.mxu0 0.0
    %185 = vmatprep.subr.mxu0 0.0
    %186 = vmatpush1.msra.mxu0 0.0
    %187 = vmatprep.subr.mxu0 0.0
    %188 = vmatpush1.msra.mxu0 0.0
    %189 = vmatprep.subr.mxu0 0.0
    %190 = vmatpush1.msra.mxu0 0.0
    %191 = vmatprep.subr.mxu0 0.0
    %192 = vmatpush1.msra.mxu0 0.0
    %193 = vmatprep.subr.mxu0 0.0
    %194 = vmatpush1.msra.mxu0 0.0
    %195 = vmatprep.subr.mxu0 0.0
    %196 = vmatpush1.msra.mxu0 0.0
    %197 = vmatprep.subr.mxu0 0.0
    %198 = vmatpush1.msra.mxu0 0.0
    %199 = vmatprep.subr.mxu0 0.0
    %200 = vmatpush1.msra.mxu0 0.0
    %201 = vmatprep.subr.mxu0 0.0
    %202 = vmatpush1.msra.mxu0 0.0
    %203 = vmatprep.subr.mxu0 0.0
    %204 = vmatpush1.msra.mxu0 0.0
    %205 = vmatprep.subr.mxu0 0.0
    %206 = vmatpush1.msra.mxu0 0.0
    %207 = vmatprep.subr.mxu0 0.0
    %208 = vmatpush1.msra.mxu0 0.0
    %209 = vmatprep.subr.mxu0 0.0
    %210 = vmatpush1.msra.mxu0 0.0
    %211 = vmatprep.subr.mxu0 0.0
    %212 = vmatpush1.msra.mxu0 0.0
    %213 = vmatprep.subr.mxu0 0.0
    %214 = vmatpush1.msra.mxu0 0.0
    %215 = vmatprep.subr.mxu0 0.0
    %216 = vmatpush1.msra.mxu0 0.0
    %217 = vmatprep.subr.mxu0 0.0
    %218 = vmatpush1.msra.mxu0 0.0
    %219 = vmatprep.subr.mxu0 0.0
    %220 = vmatpush1.msra.mxu0 0.0
    %221 = vmatprep.mubr.f32.mxu0 0.0
    %222 = vmatmul.mubr.f32.gmra.mrb[0].mxu0 %v146
    %v223 = vpop.f32.mrb[0].mxu0
    %v224 = vadd.f32 %v116, %v223
    %v225 = vpop.f32.mrb[0].mxu0
    %v226 = vadd.f32 %v117, %v225
    %227 = vmatprep.mubr.f32.mxu0 0.0
    %228 = vmatmul.mubr.f32.gmra.mrb[0].mxu0 %v149
    %v229 = vpop.f32.mrb[0].mxu0
    %v230 = vadd.f32 %v123, %v229
    %v231 = vpop.f32.mrb[0].mxu0
    %v232 = vadd.f32 %v124, %v231
    %233 = vmatprep.mubr.f32.mxu0 0.0
    %234 = vmatmul.mubr.f32.gmra.mrb[0].mxu0 %v152
    %v235 = vpop.f32.mrb[0].mxu0
    %v236 = vadd.f32 %v130, %v235
    %v237 = vpop.f32.mrb[0].mxu0
    %v238 = vadd.f32 %v131, %v237
    %239 = vmatprep.mubr.f32.mxu0 0.0
    %240 = vmatmul.mubr.f32.gmra.mrb[0].mxu0 %v155
    %v241 = vpop.f32.mrb[0].mxu0
    %v242 = vadd.f32 %v137, %v241
    %v243 = vpop.f32.mrb[0].mxu0
    %v244 = vadd.f32 %v138, %v243
    %245 = vdwg.mxu0
    %246 = vmatprep.subr.mxu0 %v63
    %247 = vmatpush1.msra.mxu0 %v62
    %248 = vmatprep.subr.mxu0 %v70
    %249 = vmatpush1.msra.mxu0 %v69
    %250 = vmatprep.subr.mxu0 %v77
    %251 = vmatpush1.msra.mxu0 %v76
    %252 = vmatprep.subr.mxu0 %v84
    %253 = vmatpush1.msra.mxu0 %v83
    %254 = vmatprep.subr.mxu0 %v91
    %255 = vmatpush1.msra.mxu0 %v90
    %256 = vmatprep.subr.mxu0 %v98
    %257 = vmatpush1.msra.mxu0 %v97
    %258 = vmatprep.subr.mxu0 %v105
    %259 = vmatpush1.msra.mxu0 %v104
    %260 = vmatprep.subr.mxu0 %v112
    %261 = vmatpush1.msra.mxu0 %v111
    %262 = vmatprep.subr.mxu0 0.0
    %263 = vmatpush1.msra.mxu0 0.0
    %264 = vmatprep.subr.mxu0 0.0
    %265 = vmatpush1.msra.mxu0 0.0
    %266 = vmatprep.subr.mxu0 0.0
    %267 = vmatpush1.msra.mxu0 0.0
    %268 = vmatprep.subr.mxu0 0.0
    %269 = vmatpush1.msra.mxu0 0.0
    %270 = vmatprep.subr.mxu0 0.0
    %271 = vmatpush1.msra.mxu0 0.0
    %272 = vmatprep.subr.mxu0 0.0
    %273 = vmatpush1.msra.mxu0 0.0
    %274 = vmatprep.subr.mxu0 0.0
    %275 = vmatpush1.msra.mxu0 0.0
    %276 = vmatprep.subr.mxu0 0.0
    %277 = vmatpush1.msra.mxu0 0.0
    %278 = vmatprep.subr.mxu0 0.0
    %279 = vmatpush1.msra.mxu0 0.0
    %280 = vmatprep.subr.mxu0 0.0
    %281 = vmatpush1.msra.mxu0 0.0
    %282 = vmatprep.subr.mxu0 0.0
    %283 = vmatpush1.msra.mxu0 0.0
    %284 = vmatprep.subr.mxu0 0.0
    %285 = vmatpush1.msra.mxu0 0.0
    %286 = vmatprep.subr.mxu0 0.0
    %287 = vmatpush1.msra.mxu0 0.0
    %288 = vmatprep.subr.mxu0 0.0
    %289 = vmatpush1.msra.mxu0 0.0
    %290 = vmatprep.subr.mxu0 0.0
    %291 = vmatpush1.msra.mxu0 0.0
    %292 = vmatprep.subr.mxu0 0.0
    %293 = vmatpush1.msra.mxu0 0.0
    %294 = vmatprep.subr.mxu0 0.0
    %295 = vmatpush1.msra.mxu0 0.0
    %296 = vmatprep.subr.mxu0 0.0
    %297 = vmatpush1.msra.mxu0 0.0
    %298 = vmatprep.subr.mxu0 0.0
    %299 = vmatpush1.msra.mxu0 0.0
    %300 = vmatprep.subr.mxu0 0.0
    %301 = vmatpush1.msra.mxu0 0.0
    %302 = vmatprep.subr.mxu0 0.0
    %303 = vmatpush1.msra.mxu0 0.0
    %304 = vmatprep.subr.mxu0 0.0
    %305 = vmatpush1.msra.mxu0 0.0
    %306 = vmatprep.subr.mxu0 0.0
    %307 = vmatpush1.msra.mxu0 0.0
    %308 = vmatprep.subr.mxu0 0.0
    %309 = vmatpush1.msra.mxu0 0.0
    %310 = vmatprep.mubr.f32.mxu0 0.0
    %311 = vmatmul.mubr.f32.gmra.mrb[0].mxu0 %v146
    %v312 = vpop.f32.mrb[0].mxu0
    %v313 = vadd.f32 %v118, %v312
    %v314 = vpop.f32.mrb[0].mxu0
    %v315 = vadd.f32 %v119, %v314
    %316 = vmatprep.mubr.f32.mxu0 0.0
    %317 = vmatmul.mubr.f32.gmra.mrb[0].mxu0 %v149
    %v318 = vpop.f32.mrb[0].mxu0
    %v319 = vadd.f32 %v125, %v318
    %v320 = vpop.f32.mrb[0].mxu0
    %v321 = vadd.f32 %v126, %v320
    %322 = vmatprep.mubr.f32.mxu0 0.0
    %323 = vmatmul.mubr.f32.gmra.mrb[0].mxu0 %v152
    %v324 = vpop.f32.mrb[0].mxu0
    %v325 = vadd.f32 %v132, %v324
    %v326 = vpop.f32.mrb[0].mxu0
    %v327 = vadd.f32 %v133, %v326
    %328 = vmatprep.mubr.f32.mxu0 0.0
    %329 = vmatmul.mubr.f32.gmra.mrb[0].mxu0 %v155
    %v330 = vpop.f32.mrb[0].mxu0
    %v331 = vadd.f32 %v139, %v330
    %v332 = vpop.f32.mrb[0].mxu0
    %v333 = vadd.f32 %v140, %v332
    %334 = vdwg.mxu0
    %335 = vmatprep.subr.mxu0 %v65
    %336 = vmatpush1.msra.mxu0 %v64
    %337 = vmatprep.subr.mxu0 %v72
    %338 = vmatpush1.msra.mxu0 %v71
    %339 = vmatprep.subr.mxu0 %v79
    %340 = vmatpush1.msra.mxu0 %v78
    %341 = vmatprep.subr.mxu0 %v86
    %342 = vmatpush1.msra.mxu0 %v85
    %343 = vmatprep.subr.mxu0 %v93
    %344 = vmatpush1.msra.mxu0 %v92
    %345 = vmatprep.subr.mxu0 %v100
    %346 = vmatpush1.msra.mxu0 %v99
    %347 = vmatprep.subr.mxu0 %v107
    %348 = vmatpush1.msra.mxu0 %v106
    %349 = vmatprep.subr.mxu0 %v114
    %350 = vmatpush1.msra.mxu0 %v113
    %351 = vmatprep.subr.mxu0 0.0
    %352 = vmatpush1.msra.mxu0 0.0
    %353 = vmatprep.subr.mxu0 0.0
    %354 = vmatpush1.msra.mxu0 0.0
    %355 = vmatprep.subr.mxu0 0.0
    %356 = vmatpush1.msra.mxu0 0.0
    %357 = vmatprep.subr.mxu0 0.0
    %358 = vmatpush1.msra.mxu0 0.0
    %359 = vmatprep.subr.mxu0 0.0
    %360 = vmatpush1.msra.mxu0 0.0
    %361 = vmatprep.subr.mxu0 0.0
    %362 = vmatpush1.msra.mxu0 0.0
    %363 = vmatprep.subr.mxu0 0.0
    %364 = vmatpush1.msra.mxu0 0.0
    %365 = vmatprep.subr.mxu0 0.0
    %366 = vmatpush1.msra.mxu0 0.0
    %367 = vmatprep.subr.mxu0 0.0
    %368 = vmatpush1.msra.mxu0 0.0
    %369 = vmatprep.subr.mxu0 0.0
    %370 = vmatpush1.msra.mxu0 0.0
    %371 = vmatprep.subr.mxu0 0.0
    %372 = vmatpush1.msra.mxu0 0.0
    %373 = vmatprep.subr.mxu0 0.0
    %374 = vmatpush1.msra.mxu0 0.0
    %375 = vmatprep.subr.mxu0 0.0
    %376 = vmatpush1.msra.mxu0 0.0
    %377 = vmatprep.subr.mxu0 0.0
    %378 = vmatpush1.msra.mxu0 0.0
    %379 = vmatprep.subr.mxu0 0.0
    %380 = vmatpush1.msra.mxu0 0.0
    %381 = vmatprep.subr.mxu0 0.0
    %382 = vmatpush1.msra.mxu0 0.0
    %383 = vmatprep.subr.mxu0 0.0
    %384 = vmatpush1.msra.mxu0 0.0
    %385 = vmatprep.subr.mxu0 0.0
    %386 = vmatpush1.msra.mxu0 0.0
    %387 = vmatprep.subr.mxu0 0.0
    %388 = vmatpush1.msra.mxu0 0.0
    %389 = vmatprep.subr.mxu0 0.0
    %390 = vmatpush1.msra.mxu0 0.0
    %391 = vmatprep.subr.mxu0 0.0
    %392 = vmatpush1.msra.mxu0 0.0
    %393 = vmatprep.subr.mxu0 0.0
    %394 = vmatpush1.msra.mxu0 0.0
    %395 = vmatprep.subr.mxu0 0.0
    %396 = vmatpush1.msra.mxu0 0.0
    %397 = vmatprep.subr.mxu0 0.0
    %398 = vmatpush1.msra.mxu0 0.0
    %399 = vmatprep.mubr.f32.mxu0 0.0
    %400 = vmatmul.mubr.f32.gmra.mrb[0].mxu0 %v146
    %v401 = vpop.f32.mrb[0].mxu0
    %v402 = vadd.f32 %v120, %v401
    %v403 = vpop.f32.mrb[0].mxu0
    %v404 = vadd.f32 %v121, %v403
    %405 = vmatprep.mubr.f32.mxu0 0.0
    %406 = vmatmul.mubr.f32.gmra.mrb[0].mxu0 %v149
    %v407 = vpop.f32.mrb[0].mxu0
    %v408 = vadd.f32 %v127, %v407
    %v409 = vpop.f32.mrb[0].mxu0
    %v410 = vadd.f32 %v128, %v409
    %411 = vmatprep.mubr.f32.mxu0 0.0
    %412 = vmatmul.mubr.f32.gmra.mrb[0].mxu0 %v152
    %v413 = vpop.f32.mrb[0].mxu0
    %v414 = vadd.f32 %v134, %v413
    %v415 = vpop.f32.mrb[0].mxu0
    %v416 = vadd.f32 %v135, %v415
    %417 = vmatprep.mubr.f32.mxu0 0.0
    %418 = vmatmul.mubr.f32.gmra.mrb[0].mxu0 %v155
    %v419 = vpop.f32.mrb[0].mxu0
    %v420 = vadd.f32 %v141, %v419
    %v421 = vpop.f32.mrb[0].mxu0
    %v422 = vadd.f32 %v142, %v421
    %423 = vdwg.mxu0
    %424 = vmatprep.subr.mxu0 0.0
    %425 = vmatpush1.msra.mxu0 %v66
    %426 = vmatprep.subr.mxu0 0.0
    %427 = vmatpush1.msra.mxu0 %v73
    %428 = vmatprep.subr.mxu0 0.0
    %429 = vmatpush1.msra.mxu0 %v80
    %430 = vmatprep.subr.mxu0 0.0
    %431 = vmatpush1.msra.mxu0 %v87
    %432 = vmatprep.subr.mxu0 0.0
    %433 = vmatpush1.msra.mxu0 %v94
    %434 = vmatprep.subr.mxu0 0.0
    %435 = vmatpush1.msra.mxu0 %v101
    %436 = vmatprep.subr.mxu0 0.0
    %437 = vmatpush1.msra.mxu0 %v108
    %438 = vmatprep.subr.mxu0 0.0
    %439 = vmatpush1.msra.mxu0 %v115
    %440 = vmatprep.subr.mxu0 0.0
    %441 = vmatpush1.msra.mxu0 0.0
    %442 = vmatprep.subr.mxu0 0.0
    %443 = vmatpush1.msra.mxu0 0.0
    %444 = vmatprep.subr.mxu0 0.0
    %445 = vmatpush1.msra.mxu0 0.0
    %446 = vmatprep.subr.mxu0 0.0
    %447 = vmatpush1.msra.mxu0 0.0
    %448 = vmatprep.subr.mxu0 0.0
    %449 = vmatpush1.msra.mxu0 0.0
    %450 = vmatprep.subr.mxu0 0.0
    %451 = vmatpush1.msra.mxu0 0.0
    %452 = vmatprep.subr.mxu0 0.0
    %453 = vmatpush1.msra.mxu0 0.0
    %454 = vmatprep.subr.mxu0 0.0
    %455 = vmatpush1.msra.mxu0 0.0
    %456 = vmatprep.subr.mxu0 0.0
    %457 = vmatpush1.msra.mxu0 0.0
    %458 = vmatprep.subr.mxu0 0.0
    %459 = vmatpush1.msra.mxu0 0.0
    %460 = vmatprep.subr.mxu0 0.0
    %461 = vmatpush1.msra.mxu0 0.0
    %462 = vmatprep.subr.mxu0 0.0
    %463 = vmatpush1.msra.mxu0 0.0
    %464 = vmatprep.subr.mxu0 0.0
    %465 = vmatpush1.msra.mxu0 0.0
    %466 = vmatprep.subr.mxu0 0.0
    %467 = vmatpush1.msra.mxu0 0.0
    %468 = vmatprep.subr.mxu0 0.0
    %469 = vmatpush1.msra.mxu0 0.0
    %470 = vmatprep.subr.mxu0 0.0
    %471 = vmatpush1.msra.mxu0 0.0
    %472 = vmatprep.subr.mxu0 0.0
    %473 = vmatpush1.msra.mxu0 0.0
    %474 = vmatprep.subr.mxu0 0.0
    %475 = vmatpush1.msra.mxu0 0.0
    %476 = vmatprep.subr.mxu0 0.0
    %477 = vmatpush1.msra.mxu0 0.0
    %478 = vmatprep.subr.mxu0 0.0
    %479 = vmatpush1.msra.mxu0 0.0
    %480 = vmatprep.subr.mxu0 0.0
    %481 = vmatpush1.msra.mxu0 0.0
    %482 = vmatprep.subr.mxu0 0.0
    %483 = vmatpush1.msra.mxu0 0.0
    %484 = vmatprep.subr.mxu0 0.0
    %485 = vmatpush1.msra.mxu0 0.0
    %486 = vmatprep.subr.mxu0 0.0
    %487 = vmatpush1.msra.mxu0 0.0
    %488 = vmatprep.mubr.f32.mxu0 0.0
    %489 = vmatmul.mubr.f32.gmra.mrb[0].mxu0 %v146
    %v490 = vpop.f32.mrb[0].mxu0
    %v491 = vadd.f32 %v122, %v490
    %v492 = vpop.f32.mrb[0].mxu0
    %493 = vmatprep.mubr.f32.mxu0 0.0
    %494 = vmatmul.mubr.f32.gmra.mrb[0].mxu0 %v149
    %v495 = vpop.f32.mrb[0].mxu0
    %v496 = vadd.f32 %v129, %v495
    %v497 = vpop.f32.mrb[0].mxu0
    %498 = vmatprep.mubr.f32.mxu0 0.0
    %499 = vmatmul.mubr.f32.gmra.mrb[0].mxu0 %v152
    %v500 = vpop.f32.mrb[0].mxu0
    %v501 = vadd.f32 %v136, %v500
    %v502 = vpop.f32.mrb[0].mxu0
    %503 = vmatprep.mubr.f32.mxu0 0.0
    %504 = vmatmul.mubr.f32.gmra.mrb[0].mxu0 %v155
    %v505 = vpop.f32.mrb[0].mxu0
    %v506 = vadd.f32 %v143, %v505
    %v507 = vpop.f32.mrb[0].mxu0
    %508 = vdwg.mxu0
    %v509 = vmul.f32 %v224, 0.5
    %v510 = vmul.f32 %v226, 0.5
    %v511 = vmul.f32 %v313, 0.5
    %v512 = vmul.f32 %v315, 0.5
    %v513 = vmul.f32 %v402, 0.5
    %v514 = vmul.f32 %v404, 0.5
    %v515 = vmul.f32 %v491, 0.5
    %v516 = vmul.f32 %v230, 0.5
    %v517 = vmul.f32 %v232, 0.5
    %v518 = vmul.f32 %v319, 0.5
    %v519 = vmul.f32 %v321, 0.5
    %v520 = vmul.f32 %v408, 0.5
    %v521 = vmul.f32 %v410, 0.5
    %v522 = vmul.f32 %v496, 0.5
    %v523 = vmul.f32 %v236, 0.5
    %v524 = vmul.f32 %v238, 0.5
    %v525 = vmul.f32 %v325, 0.5
    %v526 = vmul.f32 %v327, 0.5
    %v527 = vmul.f32 %v414, 0.5
    %v528 = vmul.f32 %v416, 0.5
    %v529 = vmul.f32 %v501, 0.5
    %v530 = vmul.f32 %v242, 0.5
    %v531 = vmul.f32 %v244, 0.5
    %v532 = vmul.f32 %v331, 0.5
    %v533 = vmul.f32 %v333, 0.5
    %v534 = vmul.f32 %v420, 0.5
    %v535 = vmul.f32 %v422, 0.5
    %v536 = vmul.f32 %v506, 0.5
    %v537 = vtanh.pop %v509
    %v538 = vtanh.pop %v510
    %v539 = vtanh.pop %v511
    %v540 = vtanh.pop %v512
    %v541 = vtanh.pop %v513
    %v542 = vtanh.pop %v514
    %v543 = vtanh.pop %v515
    %v544 = vtanh.pop %v516
    %v545 = vtanh.pop %v517
    %v546 = vtanh.pop %v518
    %v547 = vtanh.pop %v519
    %v548 = vtanh.pop %v520
    %v549 = vtanh.pop %v521
    %v550 = vtanh.pop %v522
    %v551 = vtanh.pop %v523
    %v552 = vtanh.pop %v524
    %v553 = vtanh.pop %v525
    %v554 = vtanh.pop %v526
    %v555 = vtanh.pop %v527
    %v556 = vtanh.pop %v528
    %v557 = vtanh.pop %v529
    %v558 = vtanh.pop %v530
    %v559 = vtanh.pop %v531
    %v560 = vtanh.pop %v532
    %v561 = vtanh.pop %v533
    %v562 = vtanh.pop %v534
    %v563 = vtanh.pop %v535
    %v564 = vtanh.pop %v536
    %v565 = vmul.f32 %v537, 0.5
    %v566 = vmul.f32 %v538, 0.5
    %v567 = vmul.f32 %v539, 0.5
    %v568 = vmul.f32 %v540, 0.5
    %v569 = vmul.f32 %v541, 0.5
    %v570 = vmul.f32 %v542, 0.5
    %v571 = vmul.f32 %v543, 0.5
    %v572 = vmul.f32 %v544, 0.5
    %v573 = vmul.f32 %v545, 0.5
    %v574 = vmul.f32 %v546, 0.5
    %v575 = vmul.f32 %v547, 0.5
    %v576 = vmul.f32 %v548, 0.5
    %v577 = vmul.f32 %v549, 0.5
    %v578 = vmul.f32 %v550, 0.5
    %v579 = vmul.f32 %v551, 0.5
    %v580 = vmul.f32 %v552, 0.5
    %v581 = vmul.f32 %v553, 0.5
    %v582 = vmul.f32 %v554, 0.5
    %v583 = vmul.f32 %v555, 0.5
    %v584 = vmul.f32 %v556, 0.5
    %v585 = vmul.f32 %v557, 0.5
    %v586 = vmul.f32 %v558, 0.5
    %v587 = vmul.f32 %v559, 0.5
    %v588 = vmul.f32 %v560, 0.5
    %v589 = vmul.f32 %v561, 0.5
    %v590 = vmul.f32 %v562, 0.5
    %v591 = vmul.f32 %v563, 0.5
    %v592 = vmul.f32 %v564, 0.5
    %v593 = vadd.f32 %v565, 0.5
    %v594 = vadd.f32 %v566, 0.5
    %v595 = vadd.f32 %v567, 0.5
    %v596 = vadd.f32 %v568, 0.5
    %v597 = vadd.f32 %v569, 0.5
    %v598 = vadd.f32 %v570, 0.5
    %v599 = vadd.f32 %v571, 0.5
    %v600 = vadd.f32 %v572, 0.5
    %v601 = vadd.f32 %v573, 0.5
    %v602 = vadd.f32 %v574, 0.5
    %v603 = vadd.f32 %v575, 0.5
    %v604 = vadd.f32 %v576, 0.5
    %v605 = vadd.f32 %v577, 0.5
    %v606 = vadd.f32 %v578, 0.5
    %v607 = vadd.f32 %v579, 0.5
    %v608 = vadd.f32 %v580, 0.5
    %v609 = vadd.f32 %v581, 0.5
    %v610 = vadd.f32 %v582, 0.5
    %v611 = vadd.f32 %v583, 0.5
    %v612 = vadd.f32 %v584, 0.5
    %v613 = vadd.f32 %v585, 0.5
    %v614 = vadd.f32 %v586, 0.5
    %v615 = vadd.f32 %v587, 0.5
    %v616 = vadd.f32 %v588, 0.5
    %v617 = vadd.f32 %v589, 0.5
    %v618 = vadd.f32 %v590, 0.5
    %v619 = vadd.f32 %v591, 0.5
    %v620 = vadd.f32 %v592, 0.5
    %621 = vst [vmem:[#allocation8] sm:$0xff] %v593
    %622 = vst [vmem:[#allocation8 + $0x8] sm:$0xff] %v594
    %623 = vst [vmem:[#allocation8 + $0x10] sm:$0xff] %v595
    %624 = vst [vmem:[#allocation8 + $0x18] sm:$0xff] %v596
    %625 = vst [vmem:[#allocation8 + $0x20] sm:$0xff] %v597
    %626 = vst [vmem:[#allocation8 + $0x28] sm:$0xff] %v598
    %vm627 = vcmask 785408
    %628 = vst.msk [vmem:[#allocation8 + $0x30] sm:$0xff] %vm627, %v599
    %629 = vst [vmem:[#allocation8 + $0x38] sm:$0xff] %v600
    %630 = vst [vmem:[#allocation8 + $0x40] sm:$0xff] %v601
    %631 = vst [vmem:[#allocation8 + $0x48] sm:$0xff] %v602
    %632 = vst [vmem:[#allocation8 + $0x50] sm:$0xff] %v603
    %633 = vst [vmem:[#allocation8 + $0x58] sm:$0xff] %v604
    %634 = vst [vmem:[#allocation8 + $0x60] sm:$0xff] %v605
    %635 = vst.msk [vmem:[#allocation8 + $0x68] sm:$0xff] %vm627, %v606
    %636 = vst [vmem:[#allocation8 + $0x70] sm:$0xff] %v607
    %637 = vst [vmem:[#allocation8 + $0x78] sm:$0xff] %v608
    %638 = vst [vmem:[#allocation8 + $0x80] sm:$0xff] %v609
    %639 = vst [vmem:[#allocation8 + $0x88] sm:$0xff] %v610
    %640 = vst [vmem:[#allocation8 + $0x90] sm:$0xff] %v611
    %641 = vst [vmem:[#allocation8 + $0x98] sm:$0xff] %v612
    %642 = vst.msk [vmem:[#allocation8 + $0xa0] sm:$0xff] %vm627, %v613
    %643 = vst [vmem:[#allocation8 + $0xa8] sm:$0x7f] %v614
    %644 = vst [vmem:[#allocation8 + $0xb0] sm:$0x7f] %v615
    %645 = vst [vmem:[#allocation8 + $0xb8] sm:$0x7f] %v616
    %646 = vst [vmem:[#allocation8 + $0xc0] sm:$0x7f] %v617
    %647 = vst [vmem:[#allocation8 + $0xc8] sm:$0x7f] %v618
    %648 = vst [vmem:[#allocation8 + $0xd0] sm:$0x7f] %v619
    %vm649 = vcmask 784384
    %650 = vst.msk [vmem:[#allocation8 + $0xd8] sm:$0x7f] %vm649, %v620
    // Predicated region
    $region26: #{tpu_custom_call.1} parent=1 // pred_check
      _
    $region27: #{tpu_custom_call.1} parent=1 // pred_check_branch
      %652 = sbr.rel (0) target = $region29
    $region28: #{tpu_custom_call.1} parent=1 // pred_region
      %s654 = ssub.s32 3584, 3584
      %655 = vsyncadd [#allocation4], %s654
      %s656 = sshll.u32 [#allocation8], 4
      %s657 = int_to_ptr.vmem [resolvable:$true] %s656
      %662 = dma.vmem_to_hbm [thread:$0]  %s657, 3584, %s3, [#allocation4], 896, 896, 56
    $region29: #{tpu_custom_call.1} parent=1 // pred_fallthru
      _
    // Predicated region
    $region30: #{tpu_custom_call.1} parent=1 // pred_check
      _
    $region31: #{tpu_custom_call.1} parent=1 // pred_check_branch
      %664 = sbr.rel (0) target = $region33
    $region32: #{tpu_custom_call.1} parent=1 // pred_region
      %665 = dma.done [#allocation4], 3584
    $region33: #{tpu_custom_call.1} parent=1 // pred_fallthru
      _
    %666 = vsyncpa [#allocation3], 1
    %667 = vsyncpa [#allocation6], 1
    %668 = vsyncpa [#allocation4], 1

</llo_original>
